<compile_context>
chip_gen: v7x
topology: tpu7x:2x2x1
jax: 0.10.0
libtpu: 0.0.40
codegen_flags: <defaults>
</compile_context>

<pallas_src>
import numpy as np
import jax
import jax.numpy as jnp
from jax.experimental import pallas as pl
from jax.experimental.pallas import tpu as pltpu


def _rff_kernel(x_ref, b_ref, out_ref):
    # One fused MXU matmul over 2*m_pad columns, then EUP cos/sin and two
    # lane-dense half-tile stores into the single output slab.
    m_pad = out_ref.shape[1] // 2
    proj = jnp.dot(x_ref[...], b_ref[...], preferred_element_type=jnp.float32)
    out_ref[:, :m_pad] = jnp.cos(proj[:, :m_pad]).astype(out_ref.dtype)
    out_ref[:, m_pad:] = jnp.sin(proj[:, m_pad:]).astype(out_ref.dtype)


def rff_forward(x, B, mapping_size, *, block_batch=512):
    """x: (batch, input_dim); B: (2*mapping_size, input_dim) f32 (frozen)."""
    batch, input_dim = x.shape
    m = mapping_size
    assert B.shape == (2 * m, input_dim)

    # --- weight prep (done once on a frozen constant) ----------------------
    # Pad mapping_size up to a multiple of 128 so each output half is
    # lane-dense (no masked vst).
    m_pad = max(128, ((m + 127) // 128) * 128)
    b_cos_t = jnp.transpose(B[:m]).astype(jnp.float32)   # (input_dim, m)
    b_sin_t = jnp.transpose(B[m:]).astype(jnp.float32)   # (input_dim, m)
    pad_cols = m_pad - m
    if pad_cols:
        zeros = jnp.zeros((input_dim, pad_cols), jnp.float32)
        b_cos_t = jnp.concatenate([b_cos_t, zeros], axis=1)
        b_sin_t = jnp.concatenate([b_sin_t, zeros], axis=1)
    # Fold the 2*pi factor into the weights; fuse cos/sin blocks side by side.
    b_all_t = jnp.float32(2.0 * np.pi) * jnp.concatenate(
        [b_cos_t, b_sin_t], axis=1)                       # (input_dim, 2*m_pad)

    # --- batch tiling -------------------------------------------------------
    tb = block_batch if batch >= block_batch else ((batch + 7) // 8) * 8
    batch_pad = ((batch + tb - 1) // tb) * tb
    if batch_pad != batch:
        x = jnp.pad(x, ((0, batch_pad - batch), (0, 0)))
    grid = (batch_pad // tb,)

    # --- VMEM budget / cost hints -------------------------------------------
    per_step_bytes = (tb * input_dim * 4            # x tile
                      + input_dim * 2 * m_pad * 4   # resident weights
                      + tb * 2 * m_pad * 4)         # output tile
    vmem_limit = int(min(64 * 1024 * 1024,
                         max(16 * 1024 * 1024, 4 * per_step_bytes)))
    cost = pl.CostEstimate(
        flops=2 * batch_pad * input_dim * 2 * m_pad,
        transcendentals=batch_pad * 2 * m_pad,
        bytes_accessed=(batch_pad * input_dim * 4
                        + input_dim * 2 * m_pad * 4
                        + batch_pad * 2 * m_pad * 4),
    )

    out = pl.pallas_call(
        _rff_kernel,
        out_shape=jax.ShapeDtypeStruct((batch_pad, 2 * m_pad), x.dtype),
        grid_spec=pltpu.PrefetchScalarGridSpec(
            num_scalar_prefetch=0,
            grid=grid,
            in_specs=[
                pl.BlockSpec((tb, input_dim), lambda i: (i, 0)),
                pl.BlockSpec((input_dim, 2 * m_pad), lambda i: (0, 0)),
            ],
            out_specs=pl.BlockSpec((tb, 2 * m_pad), lambda i: (i, 0)),
        ),
        compiler_params=pltpu.CompilerParams(
            dimension_semantics=("parallel",),
            vmem_limit_bytes=vmem_limit,
        ),
        cost_estimate=cost,
    )(x, b_all_t)

    if m_pad == m:
        # Output slab already has the exact [cos | sin] layout: no concat,
        # just strip any batch padding.
        return out[:batch]
    # Strip lane padding from each half and assemble [cos | sin].
    return jnp.concatenate(
        [out[:batch, :m], out[:batch, m_pad:m_pad + m]], axis=1)


def rff_reference(x, B, mapping_size):
    """Pure-JAX reference matching the PyTorch forward exactly."""
    two_pi = 2.0 * np.pi
    c = jnp.cos(two_pi * x @ B[:mapping_size].T)
    s = jnp.sin(two_pi * x @ B[mapping_size:].T)
    return jnp.concatenate([c, s], axis=1)


if __name__ == "__main__":
    input_dim = 4
    mapping_size = 32
    batch = 8
    scale = 1.0

    key = jax.random.PRNGKey(0)
    kx, kb = jax.random.split(key)

    # Deterministic "weights": B ~ Normal(0, scale), frozen (no grad).
    B = scale * jax.random.normal(kb, (2 * mapping_size, input_dim),
                                  dtype=jnp.float32)
    x = jax.random.normal(kx, (batch, input_dim), dtype=jnp.float32)

    out = rff_forward(x, B, mapping_size)
    out = jax.block_until_ready(out)

    ref = rff_reference(x, B, mapping_size)
    np.testing.assert_allclose(np.asarray(out), np.asarray(ref),
                               rtol=1e-5, atol=1e-5)
    assert out.shape == (batch, 2 * mapping_size)

    print("KERNEL_OK")
</pallas_src>

<mosaic_0001>
module attributes {stable_mosaic.version = 11 : i64} {
  func.func @_rff_kernel(%arg0: i32, %arg1: memref<8x4xf32, #tpu.memory_space<vmem>>, %arg2: memref<4x256xf32, #tpu.memory_space<vmem>>, %arg3: memref<8x256xf32, #tpu.memory_space<vmem>>) attributes {dimension_semantics = [#tpu.dimension_semantics<parallel>], iteration_bounds = array<i64: 1>, scalar_prefetch = 0 : i64, scratch_operands = 0 : i64, tpu.core_type = #tpu.core_type<tc>, window_params = [{transform_indices = @transform_0, window_bounds = array<i64: 8, 4>}, {pipeline_mode = #tpu.pipeline_mode<synchronous>, transform_indices = @transform_1, window_bounds = array<i64: 4, 256>}, {transform_indices = @transform_2, window_bounds = array<i64: 8, 256>}]} {
    %c0 = arith.constant 0 : index
    %c0_0 = arith.constant 0 : index
    %0 = vector.load %arg1[%c0, %c0_0] : memref<8x4xf32, #tpu.memory_space<vmem>>, vector<8x4xf32>
    %c0_1 = arith.constant 0 : index
    %c0_2 = arith.constant 0 : index
    %1 = vector.load %arg2[%c0_1, %c0_2] : memref<4x256xf32, #tpu.memory_space<vmem>>, vector<4x256xf32>
    %cst = arith.constant dense<0.000000e+00> : vector<8x256xf32>
    %2 = tpu.matmul %0, %1, %cst {dimension_numbers = #tpu.dot_dimension_numbers<[1], [0], [0], [1], [0, 0, 1, 1], [], []>} : vector<8x4xf32>, vector<4x256xf32>, vector<8x256xf32> -> vector<8x256xf32>
    %3 = vector.extract_strided_slice %2 {offsets = [0, 0], sizes = [8, 128], strides = [1, 1]} : vector<8x256xf32> to vector<8x128xf32>
    %4 = math.cos %3 : vector<8x128xf32>
    %c0_3 = arith.constant 0 : index
    %c0_4 = arith.constant 0 : index
    %5 = vector.load %arg3[%c0_3, %c0_4] : memref<8x256xf32, #tpu.memory_space<vmem>>, vector<8x128xf32>
    tpu.vector_store %arg3[%c0_3, %c0_4], %4 {strides = array<i32>} : memref<8x256xf32, #tpu.memory_space<vmem>>, vector<8x128xf32>,
    %6 = vector.extract_strided_slice %2 {offsets = [0, 128], sizes = [8, 128], strides = [1, 1]} : vector<8x256xf32> to vector<8x128xf32>
    %7 = math.sin %6 : vector<8x128xf32>
    %c0_5 = arith.constant 0 : index
    %c128 = arith.constant 128 : index
    %8 = vector.load %arg3[%c0_5, %c128] : memref<8x256xf32, #tpu.memory_space<vmem>>, vector<8x128xf32>
    tpu.vector_store %arg3[%c0_5, %c128], %7 {strides = array<i32>} : memref<8x256xf32, #tpu.memory_space<vmem>>, vector<8x128xf32>,
    return
  }
  func.func @transform_0(%arg0: i32) -> (i32, i32) {
    %c0_i32 = arith.constant 0 : i32
    %c0_i32_0 = arith.constant 0 : i32
    return %arg0, %c0_i32 : i32, i32
  }
  func.func @transform_1(%arg0: i32) -> (i32, i32) {
    %c0_i32 = arith.constant 0 : i32
    %c0_i32_0 = arith.constant 0 : i32
    %c0_i32_1 = arith.constant 0 : i32
    return %c0_i32, %c0_i32_0 : i32, i32
  }
  func.func @transform_2(%arg0: i32) -> (i32, i32) {
    %c0_i32 = arith.constant 0 : i32
    %c0_i32_0 = arith.constant 0 : i32
    return %arg0, %c0_i32 : i32, i32
  }
}

</mosaic_0001>

<llo_original>
// kernel: tpu_custom_call.1
$region0: #{tpu_custom_call.1}
  #allocation0 [shape = 'u32[]', space=smem, size = 0x4, offset = 0x4, fixed_abs, tag = 'smem constant byte address 0x4 - core index']
  #allocation1 [shape = 'u32[144,128]{1,0:T(1,128)}', space=vmem, size = 0x12000, scoped, tag = 'internal scratch']
  %s0 = inlined_call_operand.vmem [shape: f32[8,4], index: 0, kind: input, shape index: {}]
  %s1 = inlined_call_operand.vmem [shape: f32[4,256], index: 1, kind: input, shape index: {}]
  %s2 = inlined_call_operand.hbm [shape: f32[8,256], index: 2, kind: output, shape index: {}]
  %s3 = sld [smem:[#allocation0]]
  $region18: #{tpu_custom_call.1} parent=0
    _
  %s5 = ssub.s32 1, %s3
  %s6 = scalar_select 0, %s5, %s3
  $region1: #{tpu_custom_call.1} parent=0
    #allocation2 [shape = 'u8[8192]{0}', space=vmem, size = 0x2000, scoped, tag = 'output window, operand 0, single buffered']
    #allocation3 [shape = 's32[1]{0}', space=sflag, size = 0x4, scoped, tag = 'scoped memory for tpu_custom_call.1']
    %7 = vsyncpa [#allocation3], 0
    // Predicated region
    $region2: #{tpu_custom_call.1} parent=1 // pred_check
      _
    $region3: #{tpu_custom_call.1} parent=1 // pred_check_branch
      %9 = sbr.rel (0) target = $region5
    $region4: #{tpu_custom_call.1} parent=1 // pred_region
      _
    $region5: #{tpu_custom_call.1} parent=1 // pred_fallthru
      _
    // Predicated region
    $region6: #{tpu_custom_call.1} parent=1 // pred_check
      _
    $region7: #{tpu_custom_call.1} parent=1 // pred_check_branch
      %11 = sbr.rel (0) target = $region9
    $region8: #{tpu_custom_call.1} parent=1 // pred_region
      _
    $region9: #{tpu_custom_call.1} parent=1 // pred_fallthru
      _
    %v12 = vld [vmem:[%s0] sm:$0xff]
    %v13 = vld [vmem:[%s1] sm:$0xff]
    %v15 = vcombine.high %v13, %v13
    %vm16 = vcmask 31744
    %v18 = vsel %vm16, %v12, 0
    %vm20 = vcmask 1043456
    %v21 = vsel %vm20, %v13, 0
    %v23 = vsel %vm20, %v15, 0
    %25 = vmatprep.subr.mxu0 %v23
    %26 = vmatpush1.msra.mxu0 %v21
    %27 = vmatprep.subr.mxu0 0.0
    %28 = vmatpush1.msra.mxu0 0.0
    %29 = vmatprep.subr.mxu0 0.0
    %30 = vmatpush1.msra.mxu0 0.0
    %31 = vmatprep.subr.mxu0 0.0
    %32 = vmatpush1.msra.mxu0 0.0
    %33 = vmatprep.subr.mxu0 0.0
    %34 = vmatpush1.msra.mxu0 0.0
    %35 = vmatprep.subr.mxu0 0.0
    %36 = vmatpush1.msra.mxu0 0.0
    %37 = vmatprep.subr.mxu0 0.0
    %38 = vmatpush1.msra.mxu0 0.0
    %39 = vmatprep.subr.mxu0 0.0
    %40 = vmatpush1.msra.mxu0 0.0
    %41 = vmatprep.subr.mxu0 0.0
    %42 = vmatpush1.msra.mxu0 0.0
    %43 = vmatprep.subr.mxu0 0.0
    %44 = vmatpush1.msra.mxu0 0.0
    %45 = vmatprep.subr.mxu0 0.0
    %46 = vmatpush1.msra.mxu0 0.0
    %47 = vmatprep.subr.mxu0 0.0
    %48 = vmatpush1.msra.mxu0 0.0
    %49 = vmatprep.subr.mxu0 0.0
    %50 = vmatpush1.msra.mxu0 0.0
    %51 = vmatprep.subr.mxu0 0.0
    %52 = vmatpush1.msra.mxu0 0.0
    %53 = vmatprep.subr.mxu0 0.0
    %54 = vmatpush1.msra.mxu0 0.0
    %55 = vmatprep.subr.mxu0 0.0
    %56 = vmatpush1.msra.mxu0 0.0
    %57 = vmatprep.subr.mxu0 0.0
    %58 = vmatpush1.msra.mxu0 0.0
    %59 = vmatprep.subr.mxu0 0.0
    %60 = vmatpush1.msra.mxu0 0.0
    %61 = vmatprep.subr.mxu0 0.0
    %62 = vmatpush1.msra.mxu0 0.0
    %63 = vmatprep.subr.mxu0 0.0
    %64 = vmatpush1.msra.mxu0 0.0
    %65 = vmatprep.subr.mxu0 0.0
    %66 = vmatpush1.msra.mxu0 0.0
    %67 = vmatprep.subr.mxu0 0.0
    %68 = vmatpush1.msra.mxu0 0.0
    %69 = vmatprep.subr.mxu0 0.0
    %70 = vmatpush1.msra.mxu0 0.0
    %71 = vmatprep.subr.mxu0 0.0
    %72 = vmatpush1.msra.mxu0 0.0
    %73 = vmatprep.subr.mxu0 0.0
    %74 = vmatpush1.msra.mxu0 0.0
    %75 = vmatprep.subr.mxu0 0.0
    %76 = vmatpush1.msra.mxu0 0.0
    %77 = vmatprep.subr.mxu0 0.0
    %78 = vmatpush1.msra.mxu0 0.0
    %79 = vmatprep.subr.mxu0 0.0
    %80 = vmatpush1.msra.mxu0 0.0
    %81 = vmatprep.subr.mxu0 0.0
    %82 = vmatpush1.msra.mxu0 0.0
    %83 = vmatprep.subr.mxu0 0.0
    %84 = vmatpush1.msra.mxu0 0.0
    %85 = vmatprep.subr.mxu0 0.0
    %86 = vmatpush1.msra.mxu0 0.0
    %87 = vmatprep.subr.mxu0 0.0
    %88 = vmatpush1.msra.mxu0 0.0
    %89 = vmatprep.mubr.f32.mxu0 0.0
    %90 = vmatmul.mubr.f32.gmra.mrb[0].mxu0 %v18
    %v91 = vpop.f32.mrb[0].mxu0
    %v92 = vadd.f32 0.0, %v91
    %v93 = vpop.f32.mrb[0].mxu0
    %v94 = vadd.f32 0.0, %v93
    %95 = vdwg.mxu0
    %v96 = vand.u32 2147483647, %v92
    %vm97 = vcmp.le.f32.partialorder %v96, 0.7853982
    %vm98 = vcmp.lt.s32.totalorder %v92, 0
    %v99 = vand.u32 %v92, 2139095040
    %v100 = vshrl.u32 %v99, 23
    %v101 = vsub.s32 %v100, 127
    %v102 = vand.u32 2147483647, %v92
    %v103 = vand.u32 %v102, 8388607
    %v104 = vor.u32 %v103, 8388608
    %v105 = vsub.s32 0, %v104
    %v106 = vadd.s32 %v101, 1
    %vm107 = vcmp.gt.s32.totalorder %v106, 0
    %v108 = vsel %vm107, %v106, 0
    %v109 = vshrl.u32 %v108, 5
    %v110 = vand.u32 %v108, 31
    %v111 = vsub.s32 32, %v110
    %v112 = vshrl.u32 683565275, %v111
    %v113 = vshll.u32 683565275, %v110
    %v114 = vshrl.u32 2475754826, %v111
    %v115 = vor.u32 %v113, %v114
    %v116 = vshll.u32 2475754826, %v110
    %v117 = vshrl.u32 2131351028, %v111
    %v118 = vor.u32 %v116, %v117
    %v119 = vshll.u32 2131351028, %v110
    %v120 = vshrl.u32 2102212464, %v111
    %v121 = vor.u32 %v119, %v120
    %v122 = vshll.u32 2102212464, %v110
    %v123 = vshrl.u32 920167782, %v111
    %v124 = vor.u32 %v122, %v123
    %v125 = vshll.u32 920167782, %v110
    %v126 = vshrl.u32 1326507024, %v111
    %v127 = vor.u32 %v125, %v126
    %vm128 = vcmp.lt.s32.totalorder %v109, 1
    %vm129 = vcmp.lt.s32.totalorder %v109, 2
    %vm130 = vcmp.lt.s32.totalorder %v109, 3
    %vm131 = vcmp.lt.s32.totalorder %v109, 4
    %v132 = vsel %vm128, %v112, %v115
    %v133 = vsel %vm131, %v121, 2102212464
    %v134 = vsel %vm130, %v118, %v133
    %v135 = vsel %vm129, %v132, %v134
    %v136 = vsel %vm128, %v115, %v118
    %v137 = vsel %vm131, %v124, 920167782
    %v138 = vsel %vm130, %v121, %v137
    %v139 = vsel %vm129, %v136, %v138
    %v140 = vsel %vm128, %v118, %v121
    %v141 = vsel %vm131, %v127, 1326507024
    %v142 = vsel %vm130, %v124, %v141
    %v143 = vsel %vm129, %v140, %v142
    %v144 = vshll.u32 %v104, 8
    %v145 = vmul.u32.u64.compose %v144, %v143
    %v146 = vextract.low.u32 %v145
    %v147 = vextract.high.u32 %v145
    %v148 = vmul.u32.u64.compose %v144, %v139
    %v149 = vextract.low.u32 %v148
    %v150 = vextract.high.u32 %v148
    %v151 = vmul.u32 %v144, %v135
    %v152 = vadd.s32 %v147, %v149
    %vm153 = vc.u32 %v147, %v149
    %v154 = vadd.s32 %v150, 1
    %v155 = vsel %vm153, %v154, %v150
    %v156 = vadd.s32 %v151, %v155
    %v157 = vadd.s32 %v156, 536870912
    %v158 = vshrl.u32 %v157, 30
    %v159 = vshll.u32 %v158, 30
    %v160 = vsub.s32 %v156, %v159
    %vm161 = vcmp.lt.s32.totalorder %v160, 0
    %v162 = vsub.s32 0, %v160
    %v163 = vsel %vm161, %v162, %v160
    %v164 = vclz %v163
    %v165 = vsub.s32 %v164, 2
    %vm166 = vcmp.gt.s32.totalorder 0, %v165
    %v167 = vsel %vm166, 0, %v165
    %v168 = vsub.s32 32, %v167
    %v169 = vshll.u32 %v160, %v167
    %v170 = vshrl.u32 %v152, %v168
    %v171 = vor.u32 %v169, %v170
    %v172 = vsub.s32 4294967266, %v167
    %v173 = vadd.s32 %v172, 127
    %v174 = vshll.u32 %v173, 23
    %v175 = vor.u32 4788187, %v174
    %v176 = vand.u32 2147483647, %v175
    %v178 = vcvt.s32.f32 %v171
    %v179 = vmul.f32 %v178, %v176
    %v180 = vxor.u32 %v179, 2147483648
    %v181 = vsel %vm98, %v180, %v179
    %v182 = vsub.s32 4, %v158
    %v183 = vsel %vm98, %v182, %v158
    %v184 = vsel %vm97, %v92, %v181
    %v185 = vsel %vm97, 0, %v183
    %v186 = vcosq.f32.pop %v184
    %v187 = vsinq.f32.pop %v184
    %vm188 = vweird.f32 %v92
    %v189 = vand.u32 %v185, 3
    %vm190 = vcmp.lt.s32.totalorder %v189, 2
    %vm191 = vcmp.eq.s32.totalorder %v189, 0
    %v192 = vxor.u32 %v187, 2147483648
    %v193 = vsel %vm191, %v186, %v192
    %vm194 = vcmp.eq.s32.totalorder %v189, 2
    %v195 = vxor.u32 %v186, 2147483648
    %v196 = vsel %vm194, %v195, %v187
    %v197 = vsel %vm190, %v193, %v196
    %v198 = vsel %vm188, nan, %v197
    %199 = vst [vmem:[#allocation2] sm:$0xff] %v198
    %v200 = vand.u32 2147483647, %v94
    %vm201 = vcmp.le.f32.partialorder %v200, 0.7853982
    %vm202 = vcmp.lt.s32.totalorder %v94, 0
    %v203 = vand.u32 %v94, 2139095040
    %v204 = vshrl.u32 %v203, 23
    %v205 = vsub.s32 %v204, 127
    %v206 = vand.u32 2147483647, %v94
    %v207 = vand.u32 %v206, 8388607
    %v208 = vor.u32 %v207, 8388608
    %v209 = vsub.s32 0, %v208
    %v210 = vadd.s32 %v205, 1
    %vm211 = vcmp.gt.s32.totalorder %v210, 0
    %v212 = vsel %vm211, %v210, 0
    %v213 = vshrl.u32 %v212, 5
    %v214 = vand.u32 %v212, 31
    %v215 = vsub.s32 32, %v214
    %v216 = vshrl.u32 683565275, %v215
    %v217 = vshll.u32 683565275, %v214
    %v218 = vshrl.u32 2475754826, %v215
    %v219 = vor.u32 %v217, %v218
    %v220 = vshll.u32 2475754826, %v214
    %v221 = vshrl.u32 2131351028, %v215
    %v222 = vor.u32 %v220, %v221
    %v223 = vshll.u32 2131351028, %v214
    %v224 = vshrl.u32 2102212464, %v215
    %v225 = vor.u32 %v223, %v224
    %v226 = vshll.u32 2102212464, %v214
    %v227 = vshrl.u32 920167782, %v215
    %v228 = vor.u32 %v226, %v227
    %v229 = vshll.u32 920167782, %v214
    %v230 = vshrl.u32 1326507024, %v215
    %v231 = vor.u32 %v229, %v230
    %vm232 = vcmp.lt.s32.totalorder %v213, 1
    %vm233 = vcmp.lt.s32.totalorder %v213, 2
    %vm234 = vcmp.lt.s32.totalorder %v213, 3
    %vm235 = vcmp.lt.s32.totalorder %v213, 4
    %v236 = vsel %vm232, %v216, %v219
    %v237 = vsel %vm235, %v225, 2102212464
    %v238 = vsel %vm234, %v222, %v237
    %v239 = vsel %vm233, %v236, %v238
    %v240 = vsel %vm232, %v219, %v222
    %v241 = vsel %vm235, %v228, 920167782
    %v242 = vsel %vm234, %v225, %v241
    %v243 = vsel %vm233, %v240, %v242
    %v244 = vsel %vm232, %v222, %v225
    %v245 = vsel %vm235, %v231, 1326507024
    %v246 = vsel %vm234, %v228, %v245
    %v247 = vsel %vm233, %v244, %v246
    %v248 = vshll.u32 %v208, 8
    %v249 = vmul.u32.u64.compose %v248, %v247
    %v250 = vextract.low.u32 %v249
    %v251 = vextract.high.u32 %v249
    %v252 = vmul.u32.u64.compose %v248, %v243
    %v253 = vextract.low.u32 %v252
    %v254 = vextract.high.u32 %v252
    %v255 = vmul.u32 %v248, %v239
    %v256 = vadd.s32 %v251, %v253
    %vm257 = vc.u32 %v251, %v253
    %v258 = vadd.s32 %v254, 1
    %v259 = vsel %vm257, %v258, %v254
    %v260 = vadd.s32 %v255, %v259
    %v261 = vadd.s32 %v260, 536870912
    %v262 = vshrl.u32 %v261, 30
    %v263 = vshll.u32 %v262, 30
    %v264 = vsub.s32 %v260, %v263
    %vm265 = vcmp.lt.s32.totalorder %v264, 0
    %v266 = vsub.s32 0, %v264
    %v267 = vsel %vm265, %v266, %v264
    %v268 = vclz %v267
    %v269 = vsub.s32 %v268, 2
    %vm270 = vcmp.gt.s32.totalorder 0, %v269
    %v271 = vsel %vm270, 0, %v269
    %v272 = vsub.s32 32, %v271
    %v273 = vshll.u32 %v264, %v271
    %v274 = vshrl.u32 %v256, %v272
    %v275 = vor.u32 %v273, %v274
    %v276 = vsub.s32 4294967266, %v271
    %v277 = vadd.s32 %v276, 127
    %v278 = vshll.u32 %v277, 23
    %v279 = vor.u32 4788187, %v278
    %v280 = vand.u32 2147483647, %v279
    %v282 = vcvt.s32.f32 %v275
    %v283 = vmul.f32 %v282, %v280
    %v284 = vxor.u32 %v283, 2147483648
    %v285 = vsel %vm202, %v284, %v283
    %v286 = vsub.s32 4, %v262
    %v287 = vsel %vm202, %v286, %v262
    %v288 = vsel %vm201, %v94, %v285
    %v289 = vsel %vm201, 0, %v287
    %v290 = vcosq.f32.pop %v288
    %v291 = vsinq.f32.pop %v288
    %vm292 = vweird.f32 %v94
    %v293 = vadd.s32 %v289, 3
    %v294 = vand.u32 %v293, 3
    %vm295 = vcmp.lt.s32.totalorder %v294, 2
    %vm296 = vcmp.eq.s32.totalorder %v294, 0
    %v297 = vxor.u32 %v291, 2147483648
    %v298 = vsel %vm296, %v290, %v297
    %vm299 = vcmp.eq.s32.totalorder %v294, 2
    %v300 = vxor.u32 %v290, 2147483648
    %v301 = vsel %vm299, %v300, %v291
    %v302 = vsel %vm295, %v298, %v301
    %v303 = vsel %vm292, nan, %v302
    %304 = vst [vmem:[#allocation2 + $0x8] sm:$0xff] %v303
    // Predicated region
    $region10: #{tpu_custom_call.1} parent=1 // pred_check
      _
    $region11: #{tpu_custom_call.1} parent=1 // pred_check_branch
      %306 = sbr.rel (0) target = $region13
    $region12: #{tpu_custom_call.1} parent=1 // pred_region
      %s308 = ssub.s32 256, 256
      %309 = vsyncadd [#allocation3], %s308
      %s311 = sshll.u32 [#allocation2], 4
      %s312 = int_to_ptr.vmem [resolvable:$true] %s311
      %314 = dma.vmem_to_hbm [thread:$0]  %s312, 256, %s2, [#allocation3]
    $region13: #{tpu_custom_call.1} parent=1 // pred_fallthru
      _
    // Predicated region
    $region14: #{tpu_custom_call.1} parent=1 // pred_check
      _
    $region15: #{tpu_custom_call.1} parent=1 // pred_check_branch
      %316 = sbr.rel (0) target = $region17
    $region16: #{tpu_custom_call.1} parent=1 // pred_region
      %317 = dma.done [#allocation3], 256
    $region17: #{tpu_custom_call.1} parent=1 // pred_fallthru
      _
    %318 = vsyncpa [#allocation3], 1

</llo_original>
